<compile_context>
chip_gen: v6e
topology: v6e:2x2x1
jax: 0.10.0
libtpu: 0.0.40
codegen_flags: <defaults>
</compile_context>

<pallas_src>
import functools

import jax
import jax.numpy as jnp
from jax.experimental import pallas as pl
from jax.experimental.pallas import tpu as pltpu


def _round_up(n: int, m: int) -> int:
    return ((n + m - 1) // m) * m


def _fused_mlp_kernel(*refs, num_layers: int, relu_flags: tuple,
                      compute_dtype):
    """Whole MLP in one kernel body.

    refs = (x, w0, b0, w1, b1, ..., w_{L-1}, b_{L-1}, out); every ref is a
    full array resident in VMEM (no grid).  Intermediates stay in vregs/VMEM.
    """
    x_ref = refs[0]
    o_ref = refs[-1]
    wb = refs[1:-1]

    h = x_ref[...]
    for i in range(num_layers):
        w = wb[2 * i][...]
        b = wb[2 * i + 1][...]
        # MXU matmul with f32 accumulation; bias add + ReLU are VPU ops that
        # co-issue next to the MXU — no epilogue branches needed.
        h = jnp.dot(h.astype(compute_dtype), w.astype(compute_dtype),
                    preferred_element_type=jnp.float32) + b
        if relu_flags[i]:
            h = jnp.maximum(h, 0.0)
    o_ref[...] = h.astype(o_ref.dtype)


def fused_mlp(x, weights, biases, relu_flags, *, compute_dtype=jnp.float32):
    """y = MLP(x) with x:(M,K); weights[i]:(K_i, N_i); biases[i]:(1, N_i).

    All operands are already padded to lane/sublane-friendly shapes by the
    caller.  Single pallas_call, no grid: everything lives in VMEM.
    """
    M, K = x.shape
    num_layers = len(weights)
    assert len(biases) == num_layers and len(relu_flags) == num_layers
    assert weights[0].shape[0] == K
    n_out = weights[-1].shape[1]

    flat = []
    for w, b in zip(weights, biases):
        flat.append(w)
        flat.append(b)

    # Sanity: the fused path assumes every operand fits comfortably in VMEM
    # (true for this module: ~0.4 MiB total).  See TODO(synk) at top of file.
    total_bytes = (x.size * x.dtype.itemsize
                   + sum(a.size * a.dtype.itemsize for a in flat)
                   + M * n_out * 4)
    assert total_bytes < 12 * 1024 * 1024, (
        "fused MLP parameters do not fit the VMEM budget; use a tiled path")

    kernel = functools.partial(
        _fused_mlp_kernel,
        num_layers=num_layers,
        relu_flags=tuple(bool(r) for r in relu_flags),
        compute_dtype=compute_dtype,
    )

    vmem_spec = pl.BlockSpec(memory_space=pltpu.MemorySpace.VMEM)
    return pl.pallas_call(
        kernel,
        out_shape=jax.ShapeDtypeStruct((M, n_out), x.dtype),
        in_specs=[vmem_spec] * (1 + len(flat)),
        out_specs=vmem_spec,
    )(x, *flat)


class UnmaskingRegressivePallas:
    """JAX/Pallas port of models/unmasking.py::UnmaskingRegressive."""

    _LANE = 128      # lane width: pad every feature/hidden dim to this
    _SUBLANE = 8     # sublane count: pad batch (M) to this

    def __init__(self, param, key):
        self.dim_sequence = param["dim_sequence"]
        self.dim_features = param["dim_features"]
        self.dim_layers = param["unmasking_regressive_dim_layers"]
        self.flat_dim = self.dim_sequence * self.dim_features

        # ---- true (unpadded) parameters, matching torch.nn.Linear init ----
        self.params = []  # list of (W:(in,out), b:(out,), apply_relu)
        in_dim = self.flat_dim
        for out_dim in list(self.dim_layers):
            key, kw, kb = jax.random.split(key, 3)
            bound = 1.0 / (in_dim ** 0.5)
            w = jax.random.uniform(kw, (in_dim, out_dim), jnp.float32,
                                   -bound, bound)
            b = jax.random.uniform(kb, (out_dim,), jnp.float32, -bound, bound)
            self.params.append((w, b, True))
            in_dim = out_dim

        # output projection back to dim_sequence * dim_features (no ReLU)
        out_dim = self.flat_dim
        key, kw, kb = jax.random.split(key, 3)
        bound = 1.0 / (in_dim ** 0.5)
        w = jax.random.uniform(kw, (in_dim, out_dim), jnp.float32,
                               -bound, bound)
        b = jax.random.uniform(kb, (out_dim,), jnp.float32, -bound, bound)
        self.params.append((w, b, False))

        # ---- zero-padded parameters for the fused kernel (built once) ----
        # Pad every in/out dim up to a multiple of 128 lanes so matmuls and
        # stores are lane-dense.  Exactness argued in the header comment.
        padded = []
        prev_p = _round_up(self.flat_dim, self._LANE)
        for w, b, relu in self.params:
            k, n = w.shape
            n_p = _round_up(n, self._LANE)
            w_p = jnp.zeros((prev_p, n_p), jnp.float32).at[:k, :n].set(w)
            b_p = jnp.zeros((1, n_p), jnp.float32).at[0, :n].set(b)
            padded.append((w_p, b_p, relu))
            prev_p = n_p
        self.padded_params = padded

    def __call__(self, tensor):
        input_shape = tensor.shape
        batch = input_shape[0]
        x = tensor.reshape(batch, -1)          # flatten(start_dim=1)
        d = x.shape[1]

        m_p = max(self._SUBLANE, _round_up(batch, self._SUBLANE))
        d_p = self.padded_params[0][0].shape[0]
        x_p = jnp.zeros((m_p, d_p), x.dtype).at[:batch, :d].set(x)

        ws = [w for (w, _, _) in self.padded_params]
        bs = [b for (_, b, _) in self.padded_params]
        rl = [r for (_, _, r) in self.padded_params]

        y_p = fused_mlp(x_p, ws, bs, rl)
        y = y_p[:batch, :d]
        return y.reshape(input_shape)

    def reference(self, tensor):
        """Pure-JAX reference (unpadded params) for correctness checking."""
        input_shape = tensor.shape
        x = tensor.reshape(input_shape[0], -1)
        for w, b, relu in self.params:
            x = x @ w + b
            if relu:
                x = jnp.maximum(x, 0.0)
        return x.reshape(input_shape)


if __name__ == "__main__":
    param = {
        "dim_sequence": 8,
        "dim_features": 32,
        "unmasking_regressive_dim_layers": [128, 64],
    }

    key = jax.random.PRNGKey(0)
    key, k_in, k_model = jax.random.split(key, 3)

    batch = 2
    x = jax.random.normal(
        k_in, (batch, param["dim_sequence"], param["dim_features"]),
        jnp.float32,
    )

    model = UnmaskingRegressivePallas(param, k_model)

    out = model(x)
    out = jax.block_until_ready(out)

    ref = model.reference(x)
    assert out.shape == x.shape
    assert jnp.allclose(out, ref, atol=1e-4, rtol=1e-4)

    print("KERNEL_OK")
</pallas_src>

<mosaic_0001>
module attributes {stable_mosaic.version = 11 : i64} {
  func.func @_fused_mlp_kernel(%arg0: memref<8x256xf32, #tpu.memory_space<vmem>>, %arg1: memref<256x128xf32, #tpu.memory_space<vmem>>, %arg2: memref<1x128xf32, #tpu.memory_space<vmem>>, %arg3: memref<128x128xf32, #tpu.memory_space<vmem>>, %arg4: memref<1x128xf32, #tpu.memory_space<vmem>>, %arg5: memref<128x256xf32, #tpu.memory_space<vmem>>, %arg6: memref<1x256xf32, #tpu.memory_space<vmem>>, %arg7: memref<8x256xf32, #tpu.memory_space<vmem>>) attributes {dimension_semantics = [], scalar_prefetch = 0 : i64, scratch_operands = 0 : i64, tpu.core_type = #tpu.core_type<tc>} {
    %c0 = arith.constant 0 : index
    %c0_0 = arith.constant 0 : index
    %0 = vector.load %arg0[%c0, %c0_0] : memref<8x256xf32, #tpu.memory_space<vmem>>, vector<8x256xf32>
    %c0_1 = arith.constant 0 : index
    %c0_2 = arith.constant 0 : index
    %1 = vector.load %arg1[%c0_1, %c0_2] : memref<256x128xf32, #tpu.memory_space<vmem>>, vector<256x128xf32>
    %c0_3 = arith.constant 0 : index
    %c0_4 = arith.constant 0 : index
    %2 = vector.load %arg2[%c0_3, %c0_4] : memref<1x128xf32, #tpu.memory_space<vmem>>, vector<1x128xf32>
    %cst = arith.constant dense<0.000000e+00> : vector<8x128xf32>
    %3 = tpu.matmul %0, %1, %cst {dimension_numbers = #tpu.dot_dimension_numbers<[1], [0], [0], [1], [0, 0, 1, 1], [], []>} : vector<8x256xf32>, vector<256x128xf32>, vector<8x128xf32> -> vector<8x128xf32>
    %4 = vector.broadcast %2 : vector<1x128xf32> to vector<8x128xf32>
    %5 = arith.addf %3, %4 : vector<8x128xf32>
    %cst_5 = arith.constant 0.000000e+00 : f32
    %6 = vector.broadcast %cst_5 : f32 to vector<8x128xf32>
    %7 = arith.maximumf %5, %6 : vector<8x128xf32>
    %c0_6 = arith.constant 0 : index
    %c0_7 = arith.constant 0 : index
    %8 = vector.load %arg3[%c0_6, %c0_7] : memref<128x128xf32, #tpu.memory_space<vmem>>, vector<128x128xf32>
    %c0_8 = arith.constant 0 : index
    %c0_9 = arith.constant 0 : index
    %9 = vector.load %arg4[%c0_8, %c0_9] : memref<1x128xf32, #tpu.memory_space<vmem>>, vector<1x128xf32>
    %cst_10 = arith.constant dense<0.000000e+00> : vector<8x128xf32>
    %10 = tpu.matmul %7, %8, %cst_10 {dimension_numbers = #tpu.dot_dimension_numbers<[1], [0], [0], [1], [0, 0, 1, 1], [], []>} : vector<8x128xf32>, vector<128x128xf32>, vector<8x128xf32> -> vector<8x128xf32>
    %11 = vector.broadcast %9 : vector<1x128xf32> to vector<8x128xf32>
    %12 = arith.addf %10, %11 : vector<8x128xf32>
    %cst_11 = arith.constant 0.000000e+00 : f32
    %13 = vector.broadcast %cst_11 : f32 to vector<8x128xf32>
    %14 = arith.maximumf %12, %13 : vector<8x128xf32>
    %c0_12 = arith.constant 0 : index
    %c0_13 = arith.constant 0 : index
    %15 = vector.load %arg5[%c0_12, %c0_13] : memref<128x256xf32, #tpu.memory_space<vmem>>, vector<128x256xf32>
    %c0_14 = arith.constant 0 : index
    %c0_15 = arith.constant 0 : index
    %16 = vector.load %arg6[%c0_14, %c0_15] : memref<1x256xf32, #tpu.memory_space<vmem>>, vector<1x256xf32>
    %cst_16 = arith.constant dense<0.000000e+00> : vector<8x256xf32>
    %17 = tpu.matmul %14, %15, %cst_16 {dimension_numbers = #tpu.dot_dimension_numbers<[1], [0], [0], [1], [0, 0, 1, 1], [], []>} : vector<8x128xf32>, vector<128x256xf32>, vector<8x256xf32> -> vector<8x256xf32>
    %18 = vector.broadcast %16 : vector<1x256xf32> to vector<8x256xf32>
    %19 = arith.addf %17, %18 : vector<8x256xf32>
    %c0_17 = arith.constant 0 : index
    %c0_18 = arith.constant 0 : index
    %20 = vector.load %arg7[%c0_17, %c0_18] : memref<8x256xf32, #tpu.memory_space<vmem>>, vector<8x256xf32>
    tpu.vector_store %arg7[%c0_17, %c0_18], %19 {strides = array<i32>} : memref<8x256xf32, #tpu.memory_space<vmem>>, vector<8x256xf32>,
    return
  }
}

</mosaic_0001>

<llo_original>
// kernel: tpu_custom_call.1
$region0: #{tpu_custom_call.1}
  #allocation0 [shape = 'u32[]', space=smem, size = 0x4, offset = 0x4, fixed_abs, tag = 'smem constant byte address 0x4 - core index']
  #allocation1 [shape = 'u32[144,128]{1,0:T(1,128)}', space=vmem, size = 0x12000, scoped, tag = 'internal scratch']
  %s0 = inlined_call_operand.hbm [shape: f32[8,256], index: 0, kind: input, shape index: {}]
  %s1 = inlined_call_operand.hbm [shape: f32[256,128], index: 1, kind: input, shape index: {}]
  %s2 = inlined_call_operand.vmem [shape: f32[1,128], index: 2, kind: input, shape index: {}]
  %s3 = inlined_call_operand.hbm [shape: f32[128,128], index: 3, kind: input, shape index: {}]
  %s4 = inlined_call_operand.vmem [shape: f32[1,128], index: 4, kind: input, shape index: {}]
  %s5 = inlined_call_operand.hbm [shape: f32[128,256], index: 5, kind: input, shape index: {}]
  %s6 = inlined_call_operand.vmem [shape: f32[1,256], index: 6, kind: input, shape index: {}]
  %s7 = inlined_call_operand.hbm [shape: f32[8,256], index: 7, kind: output, shape index: {}]
  %s8 = sld [smem:[#allocation0]]
  $region54: #{tpu_custom_call.1} parent=0
    _
  %s10 = ssub.s32 1, %s8
  %s11 = scalar_select 0, %s10, %s8
  $region1: #{tpu_custom_call.1} parent=0
    #allocation2 [shape = 'u8[8192]{0}', space=vmem, size = 0x2000, scoped, tag = 'input window, operand 0, single buffered']
    #allocation3 [shape = 's32[1]{0}', space=sflag, size = 0x4, scoped, tag = 'scoped memory for tpu_custom_call.1']
    #allocation4 [shape = 's32[1]{0}', space=sflag, size = 0x4, scoped, tag = 'scoped memory for tpu_custom_call.1']
    #allocation5 [shape = 'u8[131072]{0}', space=vmem, size = 0x20000, scoped, tag = 'input window, operand 1, single buffered']
    #allocation6 [shape = 's32[1]{0}', space=sflag, size = 0x4, scoped, tag = 'scoped memory for tpu_custom_call.1']
    #allocation7 [shape = 'u8[65536]{0}', space=vmem, size = 0x10000, scoped, tag = 'input window, operand 3, single buffered']
    #allocation8 [shape = 'u8[131072]{0}', space=vmem, size = 0x20000, scoped, tag = 'input window, operand 5, single buffered']
    #allocation9 [shape = 's32[1]{0}', space=sflag, size = 0x4, scoped, tag = 'scoped memory for tpu_custom_call.1']
    #allocation10 [shape = 'u8[8192]{0}', space=vmem, size = 0x2000, scoped, tag = 'output window, operand 0, single buffered']
    %12 = vsyncpa [#allocation3], 0
    %13 = vsyncpa [#allocation6], 0
    %14 = vsyncpa [#allocation9], 0
    %15 = vsyncpa [#allocation4], 0
    // Predicated region
    $region2: #{tpu_custom_call.1} parent=1 // pred_check
      _
    $region3: #{tpu_custom_call.1} parent=1 // pred_check_branch
      %17 = sbr.rel (0) target = $region5
    $region4: #{tpu_custom_call.1} parent=1 // pred_region
      %s19 = ssub.s32 256, 256
      %20 = vsyncadd [#allocation3], %s19
      %s22 = sshll.u32 [#allocation2], 4
      %s23 = int_to_ptr.vmem [resolvable:$true] %s22
      %25 = dma.hbm_to_vmem [thread:$0]  %s0, 256, %s23, [#allocation3]
    $region5: #{tpu_custom_call.1} parent=1 // pred_fallthru
      _
    // Predicated region
    $region6: #{tpu_custom_call.1} parent=1 // pred_check
      _
    $region7: #{tpu_custom_call.1} parent=1 // pred_check_branch
      %27 = sbr.rel (0) target = $region9
    $region8: #{tpu_custom_call.1} parent=1 // pred_region
      %s29 = ssub.s32 4096, 4096
      %30 = vsyncadd [#allocation6], %s29
      %s31 = sshll.u32 [#allocation5], 4
      %s32 = int_to_ptr.vmem [resolvable:$true] %s31
      %37 = dma.hbm_to_vmem [thread:$0]  %s1, 4096, %s32, [#allocation6], 128, 128, 8
    $region9: #{tpu_custom_call.1} parent=1 // pred_fallthru
      _
    // Predicated region
    $region10: #{tpu_custom_call.1} parent=1 // pred_check
      _
    $region11: #{tpu_custom_call.1} parent=1 // pred_check_branch
      %39 = sbr.rel (0) target = $region13
    $region12: #{tpu_custom_call.1} parent=1 // pred_region
      _
    $region13: #{tpu_custom_call.1} parent=1 // pred_fallthru
      _
    // Predicated region
    $region14: #{tpu_custom_call.1} parent=1 // pred_check
      _
    $region15: #{tpu_custom_call.1} parent=1 // pred_check_branch
      %41 = sbr.rel (0) target = $region17
    $region16: #{tpu_custom_call.1} parent=1 // pred_region
      %s43 = ssub.s32 2048, 2048
      %44 = vsyncadd [#allocation6], %s43
      %s45 = sshll.u32 [#allocation7], 4
      %s46 = int_to_ptr.vmem [resolvable:$true] %s45
      %51 = dma.hbm_to_vmem [thread:$0]  %s3, 2048, %s46, [#allocation6], 128, 128, 8
    $region17: #{tpu_custom_call.1} parent=1 // pred_fallthru
      _
    // Predicated region
    $region18: #{tpu_custom_call.1} parent=1 // pred_check
      _
    $region19: #{tpu_custom_call.1} parent=1 // pred_check_branch
      %53 = sbr.rel (0) target = $region21
    $region20: #{tpu_custom_call.1} parent=1 // pred_region
      _
    $region21: #{tpu_custom_call.1} parent=1 // pred_fallthru
      _
    // Predicated region
    $region22: #{tpu_custom_call.1} parent=1 // pred_check
      _
    $region23: #{tpu_custom_call.1} parent=1 // pred_check_branch
      %55 = sbr.rel (0) target = $region25
    $region24: #{tpu_custom_call.1} parent=1 // pred_region
      %s57 = ssub.s32 4096, 4096
      %58 = vsyncadd [#allocation9], %s57
      %s59 = sshll.u32 [#allocation8], 4
      %s60 = int_to_ptr.vmem [resolvable:$true] %s59
      %65 = dma.hbm_to_vmem [thread:$0]  %s5, 4096, %s60, [#allocation9], 256, 256, 16
    $region25: #{tpu_custom_call.1} parent=1 // pred_fallthru
      _
    // Predicated region
    $region26: #{tpu_custom_call.1} parent=1 // pred_check
      _
    $region27: #{tpu_custom_call.1} parent=1 // pred_check_branch
      %67 = sbr.rel (0) target = $region29
    $region28: #{tpu_custom_call.1} parent=1 // pred_region
      _
    $region29: #{tpu_custom_call.1} parent=1 // pred_fallthru
      _
    // Predicated region
    $region30: #{tpu_custom_call.1} parent=1 // pred_check
      _
    $region31: #{tpu_custom_call.1} parent=1 // pred_check_branch
      %69 = sbr.rel (0) target = $region33
    $region32: #{tpu_custom_call.1} parent=1 // pred_region
      %70 = dma.done [#allocation3], 256
    $region33: #{tpu_custom_call.1} parent=1 // pred_fallthru
      _
    // Predicated region
    $region34: #{tpu_custom_call.1} parent=1 // pred_check
      _
    $region35: #{tpu_custom_call.1} parent=1 // pred_check_branch
      %72 = sbr.rel (0) target = $region37
    $region36: #{tpu_custom_call.1} parent=1 // pred_region
      %73 = dma.done [#allocation6], 4096
    $region37: #{tpu_custom_call.1} parent=1 // pred_fallthru
      _
    // Predicated region
    $region38: #{tpu_custom_call.1} parent=1 // pred_check
      _
    $region39: #{tpu_custom_call.1} parent=1 // pred_check_branch
      %75 = sbr.rel (0) target = $region41
    $region40: #{tpu_custom_call.1} parent=1 // pred_region
      %76 = dma.done [#allocation6], 2048
    $region41: #{tpu_custom_call.1} parent=1 // pred_fallthru
      _
    // Predicated region
    $region42: #{tpu_custom_call.1} parent=1 // pred_check
      _
    $region43: #{tpu_custom_call.1} parent=1 // pred_check_branch
      %78 = sbr.rel (0) target = $region45
    $region44: #{tpu_custom_call.1} parent=1 // pred_region
      %79 = dma.done [#allocation9], 4096
    $region45: #{tpu_custom_call.1} parent=1 // pred_fallthru
      _
    %v80 = vld [vmem:[#allocation2] sm:$0xff]
    %v81 = vld [vmem:[#allocation2 + $0x8] sm:$0xff]
    %v82 = vld [vmem:[#allocation5] sm:$0xff]
    %v83 = vld [vmem:[#allocation5 + $0x8] sm:$0xff]
    %v84 = vld [vmem:[#allocation5 + $0x10] sm:$0xff]
    %v85 = vld [vmem:[#allocation5 + $0x18] sm:$0xff]
    %v86 = vld [vmem:[#allocation5 + $0x20] sm:$0xff]
    %v87 = vld [vmem:[#allocation5 + $0x28] sm:$0xff]
    %v88 = vld [vmem:[#allocation5 + $0x30] sm:$0xff]
    %v89 = vld [vmem:[#allocation5 + $0x38] sm:$0xff]
    %v90 = vld [vmem:[#allocation5 + $0x40] sm:$0xff]
    %v91 = vld [vmem:[#allocation5 + $0x48] sm:$0xff]
    %v92 = vld [vmem:[#allocation5 + $0x50] sm:$0xff]
    %v93 = vld [vmem:[#allocation5 + $0x58] sm:$0xff]
    %v94 = vld [vmem:[#allocation5 + $0x60] sm:$0xff]
    %v95 = vld [vmem:[#allocation5 + $0x68] sm:$0xff]
    %v96 = vld [vmem:[#allocation5 + $0x70] sm:$0xff]
    %v97 = vld [vmem:[#allocation5 + $0x78] sm:$0xff]
    %v98 = vld [vmem:[#allocation5 + $0x80] sm:$0xff]
    %v99 = vld [vmem:[#allocation5 + $0x88] sm:$0xff]
    %v100 = vld [vmem:[#allocation5 + $0x90] sm:$0xff]
    %v101 = vld [vmem:[#allocation5 + $0x98] sm:$0xff]
    %v102 = vld [vmem:[#allocation5 + $0xa0] sm:$0xff]
    %v103 = vld [vmem:[#allocation5 + $0xa8] sm:$0xff]
    %v104 = vld [vmem:[#allocation5 + $0xb0] sm:$0xff]
    %v105 = vld [vmem:[#allocation5 + $0xb8] sm:$0xff]
    %v106 = vld [vmem:[#allocation5 + $0xc0] sm:$0xff]
    %v107 = vld [vmem:[#allocation5 + $0xc8] sm:$0xff]
    %v108 = vld [vmem:[#allocation5 + $0xd0] sm:$0xff]
    %v109 = vld [vmem:[#allocation5 + $0xd8] sm:$0xff]
    %v110 = vld [vmem:[#allocation5 + $0xe0] sm:$0xff]
    %v111 = vld [vmem:[#allocation5 + $0xe8] sm:$0xff]
    %v112 = vld [vmem:[#allocation5 + $0xf0] sm:$0xff]
    %v113 = vld [vmem:[#allocation5 + $0xf8] sm:$0xff]
    %v114 = vld [vmem:[%s2] sm:$0x1]
    %v116 = vlaneseq
    %v117 = vshrl.u32 %v116, 7
    %v118 = vsub.s32 0, %v117
    %v119 = vrot.slane %v114, %v118
    %121 = vmatprep.subr.mxu0 0.0
    %122 = vmatpush1.msra.mxu0 %v97
    %123 = vmatprep.subr.mxu0 0.0
    %124 = vmatpush1.msra.mxu0 %v96
    %125 = vmatprep.subr.mxu0 0.0
    %126 = vmatpush1.msra.mxu0 %v95
    %127 = vmatprep.subr.mxu0 0.0
    %128 = vmatpush1.msra.mxu0 %v94
    %129 = vmatprep.subr.mxu0 0.0
    %130 = vmatpush1.msra.mxu0 %v93
    %131 = vmatprep.subr.mxu0 0.0
    %132 = vmatpush1.msra.mxu0 %v92
    %133 = vmatprep.subr.mxu0 0.0
    %134 = vmatpush1.msra.mxu0 %v91
    %135 = vmatprep.subr.mxu0 0.0
    %136 = vmatpush1.msra.mxu0 %v90
    %137 = vmatprep.subr.mxu0 0.0
    %138 = vmatpush1.msra.mxu0 %v89
    %139 = vmatprep.subr.mxu0 0.0
    %140 = vmatpush1.msra.mxu0 %v88
    %141 = vmatprep.subr.mxu0 0.0
    %142 = vmatpush1.msra.mxu0 %v87
    %143 = vmatprep.subr.mxu0 0.0
    %144 = vmatpush1.msra.mxu0 %v86
    %145 = vmatprep.subr.mxu0 0.0
    %146 = vmatpush1.msra.mxu0 %v85
    %147 = vmatprep.subr.mxu0 0.0
    %148 = vmatpush1.msra.mxu0 %v84
    %149 = vmatprep.subr.mxu0 0.0
    %150 = vmatpush1.msra.mxu0 %v83
    %151 = vmatprep.subr.mxu0 0.0
    %152 = vmatpush1.msra.mxu0 %v82
    %153 = vmatprep.subr.mxu0 0.0
    %154 = vmatpush2.msra.mxu0 %v113
    %155 = vmatprep.subr.mxu0 0.0
    %156 = vmatpush2.msra.mxu0 %v112
    %157 = vmatprep.subr.mxu0 0.0
    %158 = vmatpush2.msra.mxu0 %v111
    %159 = vmatprep.subr.mxu0 0.0
    %160 = vmatpush2.msra.mxu0 %v110
    %161 = vmatprep.subr.mxu0 0.0
    %162 = vmatpush2.msra.mxu0 %v109
    %163 = vmatprep.subr.mxu0 0.0
    %164 = vmatpush2.msra.mxu0 %v108
    %165 = vmatprep.subr.mxu0 0.0
    %166 = vmatpush2.msra.mxu0 %v107
    %167 = vmatprep.subr.mxu0 0.0
    %168 = vmatpush2.msra.mxu0 %v106
    %169 = vmatprep.subr.mxu0 0.0
    %170 = vmatpush2.msra.mxu0 %v105
    %171 = vmatprep.subr.mxu0 0.0
    %172 = vmatpush2.msra.mxu0 %v104
    %173 = vmatprep.subr.mxu0 0.0
    %174 = vmatpush2.msra.mxu0 %v103
    %175 = vmatprep.subr.mxu0 0.0
    %176 = vmatpush2.msra.mxu0 %v102
    %177 = vmatprep.subr.mxu0 0.0
    %178 = vmatpush2.msra.mxu0 %v101
    %179 = vmatprep.subr.mxu0 0.0
    %180 = vmatpush2.msra.mxu0 %v100
    %181 = vmatprep.subr.mxu0 0.0
    %182 = vmatpush2.msra.mxu0 %v99
    %183 = vmatprep.subr.mxu0 0.0
    %184 = vmatpush2.msra.mxu0 %v98
    %185 = vmatprep.mubr.f32.mxu0 %v81
    %186 = vmatmul.mubr.f32.gmra.mxu0 %v80
    %v187 = vpop.f32.mrf.mxu0
    %v188 = vadd.f32 %v119, %v187
    %v189 = vpop.f32.mrf.mxu0
    %190 = vdwg.mxu0
    %v191 = vmax.f32 %v188, 0.0
    %v192 = vld [vmem:[#allocation7] sm:$0xff]
    %v193 = vld [vmem:[#allocation7 + $0x8] sm:$0xff]
    %v194 = vld [vmem:[#allocation7 + $0x10] sm:$0xff]
    %v195 = vld [vmem:[#allocation7 + $0x18] sm:$0xff]
    %v196 = vld [vmem:[#allocation7 + $0x20] sm:$0xff]
    %v197 = vld [vmem:[#allocation7 + $0x28] sm:$0xff]
    %v198 = vld [vmem:[#allocation7 + $0x30] sm:$0xff]
    %v199 = vld [vmem:[#allocation7 + $0x38] sm:$0xff]
    %v200 = vld [vmem:[#allocation7 + $0x40] sm:$0xff]
    %v201 = vld [vmem:[#allocation7 + $0x48] sm:$0xff]
    %v202 = vld [vmem:[#allocation7 + $0x50] sm:$0xff]
    %v203 = vld [vmem:[#allocation7 + $0x58] sm:$0xff]
    %v204 = vld [vmem:[#allocation7 + $0x60] sm:$0xff]
    %v205 = vld [vmem:[#allocation7 + $0x68] sm:$0xff]
    %v206 = vld [vmem:[#allocation7 + $0x70] sm:$0xff]
    %v207 = vld [vmem:[#allocation7 + $0x78] sm:$0xff]
    %v208 = vld [vmem:[%s4] sm:$0x1]
    %v210 = vlaneseq
    %v211 = vshrl.u32 %v210, 7
    %v212 = vsub.s32 0, %v211
    %v213 = vrot.slane %v208, %v212
    %215 = vmatprep.subr.mxu0 0.0
    %216 = vmatpush1.msra.mxu0 %v207
    %217 = vmatprep.subr.mxu0 0.0
    %218 = vmatpush1.msra.mxu0 %v206
    %219 = vmatprep.subr.mxu0 0.0
    %220 = vmatpush1.msra.mxu0 %v205
    %221 = vmatprep.subr.mxu0 0.0
    %222 = vmatpush1.msra.mxu0 %v204
    %223 = vmatprep.subr.mxu0 0.0
    %224 = vmatpush1.msra.mxu0 %v203
    %225 = vmatprep.subr.mxu0 0.0
    %226 = vmatpush1.msra.mxu0 %v202
    %227 = vmatprep.subr.mxu0 0.0
    %228 = vmatpush1.msra.mxu0 %v201
    %229 = vmatprep.subr.mxu0 0.0
    %230 = vmatpush1.msra.mxu0 %v200
    %231 = vmatprep.subr.mxu0 0.0
    %232 = vmatpush1.msra.mxu0 %v199
    %233 = vmatprep.subr.mxu0 0.0
    %234 = vmatpush1.msra.mxu0 %v198
    %235 = vmatprep.subr.mxu0 0.0
    %236 = vmatpush1.msra.mxu0 %v197
    %237 = vmatprep.subr.mxu0 0.0
    %238 = vmatpush1.msra.mxu0 %v196
    %239 = vmatprep.subr.mxu0 0.0
    %240 = vmatpush1.msra.mxu0 %v195
    %241 = vmatprep.subr.mxu0 0.0
    %242 = vmatpush1.msra.mxu0 %v194
    %243 = vmatprep.subr.mxu0 0.0
    %244 = vmatpush1.msra.mxu0 %v193
    %245 = vmatprep.subr.mxu0 0.0
    %246 = vmatpush1.msra.mxu0 %v192
    %247 = vmatprep.subr.mxu0 0.0
    %248 = vmatpush2.msra.mxu0 0.0
    %249 = vmatprep.subr.mxu0 0.0
    %250 = vmatpush2.msra.mxu0 0.0
    %251 = vmatprep.subr.mxu0 0.0
    %252 = vmatpush2.msra.mxu0 0.0
    %253 = vmatprep.subr.mxu0 0.0
    %254 = vmatpush2.msra.mxu0 0.0
    %255 = vmatprep.subr.mxu0 0.0
    %256 = vmatpush2.msra.mxu0 0.0
    %257 = vmatprep.subr.mxu0 0.0
    %258 = vmatpush2.msra.mxu0 0.0
    %259 = vmatprep.subr.mxu0 0.0
    %260 = vmatpush2.msra.mxu0 0.0
    %261 = vmatprep.subr.mxu0 0.0
    %262 = vmatpush2.msra.mxu0 0.0
    %263 = vmatprep.subr.mxu0 0.0
    %264 = vmatpush2.msra.mxu0 0.0
    %265 = vmatprep.subr.mxu0 0.0
    %266 = vmatpush2.msra.mxu0 0.0
    %267 = vmatprep.subr.mxu0 0.0
    %268 = vmatpush2.msra.mxu0 0.0
    %269 = vmatprep.subr.mxu0 0.0
    %270 = vmatpush2.msra.mxu0 0.0
    %271 = vmatprep.subr.mxu0 0.0
    %272 = vmatpush2.msra.mxu0 0.0
    %273 = vmatprep.subr.mxu0 0.0
    %274 = vmatpush2.msra.mxu0 0.0
    %275 = vmatprep.subr.mxu0 0.0
    %276 = vmatpush2.msra.mxu0 0.0
    %277 = vmatprep.subr.mxu0 0.0
    %278 = vmatpush2.msra.mxu0 0.0
    %279 = vmatprep.mubr.f32.mxu0 0.0
    %280 = vmatmul.mubr.f32.gmra.mxu0 %v191
    %v281 = vpop.f32.mrf.mxu0
    %v282 = vadd.f32 %v213, %v281
    %v283 = vpop.f32.mrf.mxu0
    %284 = vdwg.mxu0
    %v285 = vmax.f32 %v282, 0.0
    %v286 = vld [vmem:[#allocation8] sm:$0xff]
    %v287 = vld [vmem:[#allocation8 + $0x8] sm:$0xff]
    %v288 = vld [vmem:[#allocation8 + $0x10] sm:$0xff]
    %v289 = vld [vmem:[#allocation8 + $0x18] sm:$0xff]
    %v290 = vld [vmem:[#allocation8 + $0x20] sm:$0xff]
    %v291 = vld [vmem:[#allocation8 + $0x28] sm:$0xff]
    %v292 = vld [vmem:[#allocation8 + $0x30] sm:$0xff]
    %v293 = vld [vmem:[#allocation8 + $0x38] sm:$0xff]
    %v294 = vld [vmem:[#allocation8 + $0x40] sm:$0xff]
    %v295 = vld [vmem:[#allocation8 + $0x48] sm:$0xff]
    %v296 = vld [vmem:[#allocation8 + $0x50] sm:$0xff]
    %v297 = vld [vmem:[#allocation8 + $0x58] sm:$0xff]
    %v298 = vld [vmem:[#allocation8 + $0x60] sm:$0xff]
    %v299 = vld [vmem:[#allocation8 + $0x68] sm:$0xff]
    %v300 = vld [vmem:[#allocation8 + $0x70] sm:$0xff]
    %v301 = vld [vmem:[#allocation8 + $0x78] sm:$0xff]
    %v302 = vld [vmem:[#allocation8 + $0x80] sm:$0xff]
    %v303 = vld [vmem:[#allocation8 + $0x88] sm:$0xff]
    %v304 = vld [vmem:[#allocation8 + $0x90] sm:$0xff]
    %v305 = vld [vmem:[#allocation8 + $0x98] sm:$0xff]
    %v306 = vld [vmem:[#allocation8 + $0xa0] sm:$0xff]
    %v307 = vld [vmem:[#allocation8 + $0xa8] sm:$0xff]
    %v308 = vld [vmem:[#allocation8 + $0xb0] sm:$0xff]
    %v309 = vld [vmem:[#allocation8 + $0xb8] sm:$0xff]
    %v310 = vld [vmem:[#allocation8 + $0xc0] sm:$0xff]
    %v311 = vld [vmem:[#allocation8 + $0xc8] sm:$0xff]
    %v312 = vld [vmem:[#allocation8 + $0xd0] sm:$0xff]
    %v313 = vld [vmem:[#allocation8 + $0xd8] sm:$0xff]
    %v314 = vld [vmem:[#allocation8 + $0xe0] sm:$0xff]
    %v315 = vld [vmem:[#allocation8 + $0xe8] sm:$0xff]
    %v316 = vld [vmem:[#allocation8 + $0xf0] sm:$0xff]
    %v317 = vld [vmem:[#allocation8 + $0xf8] sm:$0xff]
    %v318 = vld [vmem:[%s6] sm:$0x3]
    %v320 = vlaneseq
    %v321 = vshrl.u32 %v320, 7
    %v322 = vsub.s32 0, %v321
    %v323 = vrot.slane %v318, %v322
    %v324 = vlaneseq
    %v325 = vshrl.u32 %v324, 7
    %v326 = vsub.s32 1, %v325
    %v327 = vrot.slane %v318, %v326
    %330 = vmatprep.subr.mxu0 %v317
    %331 = vmatpush1.msra.mxu0 %v316
    %332 = vmatprep.subr.mxu0 %v315
    %333 = vmatpush1.msra.mxu0 %v314
    %334 = vmatprep.subr.mxu0 %v313
    %335 = vmatpush1.msra.mxu0 %v312
    %336 = vmatprep.subr.mxu0 %v311
    %337 = vmatpush1.msra.mxu0 %v310
    %338 = vmatprep.subr.mxu0 %v309
    %339 = vmatpush1.msra.mxu0 %v308
    %340 = vmatprep.subr.mxu0 %v307
    %341 = vmatpush1.msra.mxu0 %v306
    %342 = vmatprep.subr.mxu0 %v305
    %343 = vmatpush1.msra.mxu0 %v304
    %344 = vmatprep.subr.mxu0 %v303
    %345 = vmatpush1.msra.mxu0 %v302
    %346 = vmatprep.subr.mxu0 %v301
    %347 = vmatpush1.msra.mxu0 %v300
    %348 = vmatprep.subr.mxu0 %v299
    %349 = vmatpush1.msra.mxu0 %v298
    %350 = vmatprep.subr.mxu0 %v297
    %351 = vmatpush1.msra.mxu0 %v296
    %352 = vmatprep.subr.mxu0 %v295
    %353 = vmatpush1.msra.mxu0 %v294
    %354 = vmatprep.subr.mxu0 %v293
    %355 = vmatpush1.msra.mxu0 %v292
    %356 = vmatprep.subr.mxu0 %v291
    %357 = vmatpush1.msra.mxu0 %v290
    %358 = vmatprep.subr.mxu0 %v289
    %359 = vmatpush1.msra.mxu0 %v288
    %360 = vmatprep.subr.mxu0 %v287
    %361 = vmatpush1.msra.mxu0 %v286
    %362 = vmatprep.subr.mxu0 0.0
    %363 = vmatpush2.msra.mxu0 0.0
    %364 = vmatprep.subr.mxu0 0.0
    %365 = vmatpush2.msra.mxu0 0.0
    %366 = vmatprep.subr.mxu0 0.0
    %367 = vmatpush2.msra.mxu0 0.0
    %368 = vmatprep.subr.mxu0 0.0
    %369 = vmatpush2.msra.mxu0 0.0
    %370 = vmatprep.subr.mxu0 0.0
    %371 = vmatpush2.msra.mxu0 0.0
    %372 = vmatprep.subr.mxu0 0.0
    %373 = vmatpush2.msra.mxu0 0.0
    %374 = vmatprep.subr.mxu0 0.0
    %375 = vmatpush2.msra.mxu0 0.0
    %376 = vmatprep.subr.mxu0 0.0
    %377 = vmatpush2.msra.mxu0 0.0
    %378 = vmatprep.subr.mxu0 0.0
    %379 = vmatpush2.msra.mxu0 0.0
    %380 = vmatprep.subr.mxu0 0.0
    %381 = vmatpush2.msra.mxu0 0.0
    %382 = vmatprep.subr.mxu0 0.0
    %383 = vmatpush2.msra.mxu0 0.0
    %384 = vmatprep.subr.mxu0 0.0
    %385 = vmatpush2.msra.mxu0 0.0
    %386 = vmatprep.subr.mxu0 0.0
    %387 = vmatpush2.msra.mxu0 0.0
    %388 = vmatprep.subr.mxu0 0.0
    %389 = vmatpush2.msra.mxu0 0.0
    %390 = vmatprep.subr.mxu0 0.0
    %391 = vmatpush2.msra.mxu0 0.0
    %392 = vmatprep.subr.mxu0 0.0
    %393 = vmatpush2.msra.mxu0 0.0
    %394 = vmatprep.mubr.f32.mxu0 0.0
    %395 = vmatmul.mubr.f32.gmra.mxu0 %v285
    %v396 = vpop.f32.mrf.mxu0
    %v397 = vadd.f32 %v323, %v396
    %v398 = vpop.f32.mrf.mxu0
    %v399 = vadd.f32 %v327, %v398
    %400 = vdwg.mxu0
    %401 = vst [vmem:[#allocation10] sm:$0xff] %v397
    %402 = vst [vmem:[#allocation10 + $0x8] sm:$0xff] %v399
    // Predicated region
    $region46: #{tpu_custom_call.1} parent=1 // pred_check
      _
    $region47: #{tpu_custom_call.1} parent=1 // pred_check_branch
      %404 = sbr.rel (0) target = $region49
    $region48: #{tpu_custom_call.1} parent=1 // pred_region
      %s406 = ssub.s32 256, 256
      %407 = vsyncadd [#allocation4], %s406
      %s409 = sshll.u32 [#allocation10], 4
      %s410 = int_to_ptr.vmem [resolvable:$true] %s409
      %412 = dma.vmem_to_hbm [thread:$0]  %s410, 256, %s7, [#allocation4]
    $region49: #{tpu_custom_call.1} parent=1 // pred_fallthru
      _
    // Predicated region
    $region50: #{tpu_custom_call.1} parent=1 // pred_check
      _
    $region51: #{tpu_custom_call.1} parent=1 // pred_check_branch
      %414 = sbr.rel (0) target = $region53
    $region52: #{tpu_custom_call.1} parent=1 // pred_region
      %415 = dma.done [#allocation4], 256
    $region53: #{tpu_custom_call.1} parent=1 // pred_fallthru
      _
    %416 = vsyncpa [#allocation3], 1
    %417 = vsyncpa [#allocation6], 1
    %418 = vsyncpa [#allocation9], 1
    %419 = vsyncpa [#allocation4], 1

</llo_original>
